<compile_context>
chip_gen: v6e
topology: v6e:2x2x1
jax: 0.10.0
libtpu: 0.0.40
codegen_flags: <defaults>
</compile_context>

<pallas_src>
import functools
import math

import jax
import jax.numpy as jnp
from jax import lax
from jax.experimental import pallas as pl
from jax.experimental.pallas import tpu as pltpu


# ----------------------------------------------------------------------------
# Kernel 1: focal-loss partial sums, tiled over rows of the flattened heatmap.
#   pred_ref : (TILE_R, L) raw logits of output['hm']   (any float dtype)
#   gt_ref   : (TILE_R, L) batch['hm']
#   out_ref  : (3,) f32 SMEM   [pos_loss_sum, neg_loss_sum, num_pos]
#   acc_ref  : (3,) f32 SMEM scratch accumulator (resident across the grid)
# ----------------------------------------------------------------------------
_LOG_EPS = math.log(1e-4)
_LOG_ONE_M_EPS = math.log(1.0 - 1e-4)


def _focal_sums_kernel(pred_ref, gt_ref, out_ref, acc_ref):
    step = pl.program_id(0)

    @pl.when(step == 0)
    def _init():
        acc_ref[0] = jnp.float32(0.0)
        acc_ref[1] = jnp.float32(0.0)
        acc_ref[2] = jnp.float32(0.0)

    x = pred_ref[...].astype(jnp.float32)
    gt = gt_ref[...].astype(jnp.float32)

    # One exp + one log per element instead of sigmoid + 2x log:
    #   e = exp(-|x|)
    #   log(sigmoid(x))     = min(x, 0) - log(1 + e)
    #   log(1 - sigmoid(x)) = -max(x, 0) - log(1 + e)
    # The _sigmoid clamp p in [1e-4, 1-1e-4] becomes a clamp on the log values.
    e = jnp.exp(-jnp.abs(x))
    log1pe = jnp.log(1.0 + e)
    log_p = jnp.clip(jnp.minimum(x, 0.0) - log1pe, _LOG_EPS, _LOG_ONE_M_EPS)
    log_1mp = jnp.clip(-jnp.maximum(x, 0.0) - log1pe, _LOG_EPS, _LOG_ONE_M_EPS)

    # Clamped sigmoid value for the modulating factors (approx recip -> EUP slot).
    inv = pl.reciprocal(1.0 + e, approx=True)
    p = jnp.where(x >= 0, inv, e * inv)
    p = jnp.clip(p, 1e-4, 1.0 - 1e-4)
    one_m_p = 1.0 - p

    pos_mask = gt == 1.0
    neg_mask = gt < 1.0

    # (1 - gt)^4 via two VPU squarings (no pow / transcendentals).
    omg = 1.0 - gt
    omg2 = omg * omg
    neg_w = omg2 * omg2

    pos_loss = jnp.where(pos_mask, log_p * (one_m_p * one_m_p), 0.0)
    neg_loss = jnp.where(neg_mask, log_1mp * (p * p) * neg_w, 0.0)

    acc_ref[0] = acc_ref[0] + jnp.sum(pos_loss)
    acc_ref[1] = acc_ref[1] + jnp.sum(neg_loss)
    acc_ref[2] = acc_ref[2] + jnp.sum(pos_mask.astype(jnp.float32))

    @pl.when(step == pl.num_programs(0) - 1)
    def _finalize():
        out_ref[0] = acc_ref[0]
        out_ref[1] = acc_ref[1]
        out_ref[2] = acc_ref[2]


def _pick_row_tile(n_rows, n_lanes, budget_bytes=2 * 1024 * 1024):
    """Largest row tile that divides n_rows exactly and keeps one f32 input
    buffer under `budget_bytes` (2 inputs x 2 pipeline buffers stay well inside
    even v5e's 16 MiB / v7x's 32 MiB scoped VMEM)."""
    cap = max(1, budget_bytes // max(1, 4 * n_lanes))
    if cap >= n_rows:
        return n_rows
    divisors = [d for d in range(1, cap + 1) if n_rows % d == 0]
    mult8 = [d for d in divisors if d % 8 == 0]
    return max(mult8) if mult8 else max(divisors)


def focal_loss(pred_logits, gt):
    """FocalLoss(_sigmoid(pred_logits), gt) — CenterNet _neg_loss."""
    B, C, H, W = pred_logits.shape
    R, L = B * C, H * W
    p2 = pred_logits.reshape(R, L)   # keep input dtype (bf16 heads stream half the bytes)
    g2 = gt.reshape(R, L)

    tile_r = _pick_row_tile(R, L)
    grid = (R // tile_r,)

    sums = pl.pallas_call(
        _focal_sums_kernel,
        out_shape=jax.ShapeDtypeStruct((3,), jnp.float32),
        grid=grid,
        in_specs=[
            pl.BlockSpec((tile_r, L), lambda i: (i, 0)),
            pl.BlockSpec((tile_r, L), lambda i: (i, 0)),
        ],
        out_specs=pl.BlockSpec(memory_space=pltpu.MemorySpace.SMEM),
        scratch_shapes=[pltpu.SMEM((3,), jnp.float32)],
        compiler_params=pltpu.CompilerParams(
            dimension_semantics=("arbitrary",),       # accumulator carried across the grid
            vmem_limit_bytes=32 * 1024 * 1024,        # safe on v5e/v6e/v7x
        ),
    )(p2, g2)

    pos_sum, neg_sum, num_pos = sums[0], sums[1], sums[2]
    # if num_pos == 0: loss = -neg_loss  else: loss = -(pos_loss + neg_loss) / num_pos
    return jnp.where(num_pos == 0.0, -neg_sum,
                     -(pos_sum + neg_sum) / jnp.maximum(num_pos, 1.0))


# ----------------------------------------------------------------------------
# Kernel 2: fused RegL1Loss for the 'wh' and 'reg' heads (shared ind / mask).
#   ind_ref            : (BK,)    i32  SMEM  -- flat indices into (B*H*W)
#   mask_ref           : (BK,)    f32  SMEM  -- reg_mask
#   wh_feat / reg_feat : (BHW, C) VMEM       -- heads, NHWC-flattened
#   wh_tgt  / reg_tgt  : (BK,  C) VMEM
#   out_ref            : (3,) f32 SMEM  [wh_abs_sum, off_abs_sum, mask_sum]
# Gather = one dynamic sublane-slice load per object (no one-hot matmul).
# ----------------------------------------------------------------------------
def _fused_reg_l1_kernel(ind_ref, mask_ref, wh_feat_ref, reg_feat_ref,
                         wh_tgt_ref, reg_tgt_ref, out_ref, *, bk):
    n_ch = wh_feat_ref.shape[1]

    def body(i, carry):
        wh_acc, off_acc, m_acc = carry
        idx = ind_ref[i]
        m = mask_ref[i]
        w_pred = wh_feat_ref[pl.ds(idx, 1), :].astype(jnp.float32)   # (1, C)
        r_pred = reg_feat_ref[pl.ds(idx, 1), :].astype(jnp.float32)  # (1, C)
        w_tgt = wh_tgt_ref[pl.ds(i, 1), :].astype(jnp.float32)       # (1, C)
        r_tgt = reg_tgt_ref[pl.ds(i, 1), :].astype(jnp.float32)      # (1, C)
        wh_acc = wh_acc + m * jnp.abs(w_pred - w_tgt)
        off_acc = off_acc + m * jnp.abs(r_pred - r_tgt)
        m_acc = m_acc + m
        return wh_acc, off_acc, m_acc

    init = (jnp.zeros((1, n_ch), jnp.float32),
            jnp.zeros((1, n_ch), jnp.float32),
            jnp.zeros((1, 1), jnp.float32))
    wh_acc, off_acc, m_acc = lax.fori_loop(0, bk, body, init)

    out_ref[0] = jnp.sum(wh_acc)
    out_ref[1] = jnp.sum(off_acc)
    out_ref[2] = m_acc[0, 0]


def fused_reg_l1_loss(wh_map, reg_map, mask, ind, wh_target, reg_target):
    """Two RegL1Loss terms (wh head, reg/offset head) sharing ind + reg_mask.

    Returns (wh_loss, off_loss) matching:
        F.l1_loss(pred*m, target*m, reduction='sum') / (m.expand_as(pred).sum() + 1e-4)
    """
    B, C, H, W = wh_map.shape
    assert reg_map.shape == (B, C, H, W), "fused path assumes equal channel count"
    K = ind.shape[1]
    HW = H * W
    BK = B * K

    wh_feat = jnp.transpose(wh_map, (0, 2, 3, 1)).reshape(B * HW, C)
    reg_feat = jnp.transpose(reg_map, (0, 2, 3, 1)).reshape(B * HW, C)
    flat_ind = (ind.astype(jnp.int32)
                + jnp.arange(B, dtype=jnp.int32)[:, None] * HW).reshape(BK)
    mask_f = mask.reshape(BK).astype(jnp.float32)
    wh_tgt = wh_target.reshape(BK, C)
    reg_tgt = reg_target.reshape(BK, C)

    out = pl.pallas_call(
        functools.partial(_fused_reg_l1_kernel, bk=BK),
        out_shape=jax.ShapeDtypeStruct((3,), jnp.float32),
        in_specs=[
            pl.BlockSpec(memory_space=pltpu.MemorySpace.SMEM),   # flat indices
            pl.BlockSpec(memory_space=pltpu.MemorySpace.SMEM),   # reg_mask
            pl.BlockSpec(memory_space=pltpu.MemorySpace.VMEM),   # wh feature map
            pl.BlockSpec(memory_space=pltpu.MemorySpace.VMEM),   # reg feature map
            pl.BlockSpec(memory_space=pltpu.MemorySpace.VMEM),   # wh targets
            pl.BlockSpec(memory_space=pltpu.MemorySpace.VMEM),   # reg targets
        ],
        out_specs=pl.BlockSpec(memory_space=pltpu.MemorySpace.SMEM),
        compiler_params=pltpu.CompilerParams(vmem_limit_bytes=32 * 1024 * 1024),
    )(flat_ind, mask_f, wh_feat, reg_feat, wh_tgt, reg_tgt)

    denom = out[2] * jnp.float32(C) + 1e-4   # mask expanded to (B,K,C) before .sum()
    return out[0] / denom, out[1] / denom


# ----------------------------------------------------------------------------
# CtdetLoss.forward
# ----------------------------------------------------------------------------
def ctdet_loss(outputs, batch, opt):
    num_stacks = opt["num_stacks"]
    hm_loss = jnp.float32(0.0)
    wh_loss = jnp.float32(0.0)
    off_loss = jnp.float32(0.0)

    want_wh = opt["wh_weight"] > 0
    want_off = opt["reg_offset"] and opt["off_weight"] > 0

    for s in range(num_stacks):
        output = outputs[s]
        # not mse_loss -> _sigmoid is fused inside the focal kernel
        hm_loss = hm_loss + focal_loss(output["hm"], batch["hm"]) / num_stacks

        if want_wh and want_off:
            # dense_wh=False, cat_spec_wh=False -> crit_wh == crit_reg == RegL1Loss;
            # both heads share ind/reg_mask so they run in one fused kernel.
            wl, ol = fused_reg_l1_loss(output["wh"], output["reg"], batch["reg_mask"],
                                       batch["ind"], batch["wh"], batch["reg"])
            wh_loss = wh_loss + wl / num_stacks
            off_loss = off_loss + ol / num_stacks
        elif want_wh:
            wl, _ = fused_reg_l1_loss(output["wh"], output["wh"], batch["reg_mask"],
                                      batch["ind"], batch["wh"], batch["wh"])
            wh_loss = wh_loss + wl / num_stacks
        elif want_off:
            _, ol = fused_reg_l1_loss(output["reg"], output["reg"], batch["reg_mask"],
                                      batch["ind"], batch["reg"], batch["reg"])
            off_loss = off_loss + ol / num_stacks

    loss = (opt["hm_weight"] * hm_loss
            + opt["wh_weight"] * wh_loss
            + opt["off_weight"] * off_loss)
    loss_stats = {"loss": loss, "hm_loss": hm_loss,
                  "wh_loss": wh_loss, "off_loss": off_loss}
    return loss, loss_stats


if __name__ == "__main__":
    key = jax.random.PRNGKey(0)
    B, C, H, W, K = 2, 4, 16, 16, 8  # batch, classes, spatial, max objects

    k1, k2, k3, k4, k5, k6, k7 = jax.random.split(key, 7)

    # network outputs (NCHW, as in PyTorch)
    outputs = [{
        "hm": jax.random.normal(k1, (B, C, H, W), jnp.float32),
        "wh": jax.random.normal(k2, (B, 2, H, W), jnp.float32) * 2.0,
        "reg": jax.random.normal(k3, (B, 2, H, W), jnp.float32) * 0.5,
    }]

    # ground-truth batch
    ind = jax.random.randint(k4, (B, K), 0, H * W, dtype=jnp.int32)
    reg_mask = (jnp.arange(K)[None, :] < jnp.array([[5], [3]])).astype(jnp.float32)

    # gaussian-ish heatmap in [0, 0.9] with exact 1.0 peaks at object centers
    gt_hm = jax.random.uniform(k5, (B, C, H, W), jnp.float32, 0.0, 0.9)
    cls = jax.random.randint(k6, (B, K), 0, C, dtype=jnp.int32)
    b_ids = jnp.repeat(jnp.arange(B), K)
    gt_hm = gt_hm.at[b_ids, cls.reshape(-1),
                     (ind // W).reshape(-1), (ind % W).reshape(-1)].set(1.0)

    batch = {
        "hm": gt_hm,
        "ind": ind,
        "reg_mask": reg_mask,
        "wh": jax.random.uniform(k7, (B, K, 2), jnp.float32, 1.0, 8.0),
        "reg": jax.random.uniform(k1, (B, K, 2), jnp.float32, 0.0, 1.0),
    }

    opt = {"num_stacks": 1, "hm_weight": 1.0, "wh_weight": 0.1, "off_weight": 1.0,
           "reg_offset": True}

    loss, stats = ctdet_loss(outputs, batch, opt)
    jax.block_until_ready(loss)
    assert jnp.isfinite(loss), "loss is not finite"
    print("KERNEL_OK")
</pallas_src>

<mosaic_0001>
module attributes {stable_mosaic.version = 11 : i64} {
  func.func @_focal_sums_kernel(%arg0: i32, %arg1: memref<8x256xf32, #tpu.memory_space<vmem>>, %arg2: memref<8x256xf32, #tpu.memory_space<vmem>>, %arg3: memref<3xf32, #tpu.memory_space<smem>>, %arg4: memref<3xf32, #tpu.memory_space<smem>>) attributes {dimension_semantics = [#tpu.dimension_semantics<arbitrary>], iteration_bounds = array<i64: 1>, scalar_prefetch = 0 : i64, scratch_operands = 1 : i64, tpu.core_type = #tpu.core_type<tc>, window_params = [{transform_indices = @transform_0, window_bounds = array<i64: 8, 256>}, {transform_indices = @transform_1, window_bounds = array<i64: 8, 256>}, {transform_indices = @transform_2, window_bounds = array<i64: 3>}]} {
    %c0_i32 = arith.constant 0 : i32
    %0 = arith.cmpi eq, %arg0, %c0_i32 : i32
    %1 = arith.extui %0 : i1 to i32
    %c0_i32_0 = arith.constant 0 : i32
    %2 = arith.cmpi ne, %1, %c0_i32_0 : i32
    scf.if %2 {
      %cst_31 = arith.constant 0.000000e+00 : f32
      %c0_32 = arith.constant 0 : index
      %84 = memref.load %arg4[%c0_32] : memref<3xf32, #tpu.memory_space<smem>>
      memref.store %cst_31, %arg4[%c0_32] : memref<3xf32, #tpu.memory_space<smem>>
      %cst_33 = arith.constant 0.000000e+00 : f32
      %c1_34 = arith.constant 1 : index
      %85 = memref.load %arg4[%c1_34] : memref<3xf32, #tpu.memory_space<smem>>
      memref.store %cst_33, %arg4[%c1_34] : memref<3xf32, #tpu.memory_space<smem>>
      %cst_35 = arith.constant 0.000000e+00 : f32
      %c2_36 = arith.constant 2 : index
      %86 = memref.load %arg4[%c2_36] : memref<3xf32, #tpu.memory_space<smem>>
      memref.store %cst_35, %arg4[%c2_36] : memref<3xf32, #tpu.memory_space<smem>>
    } else {
    }
    %c0 = arith.constant 0 : index
    %c0_1 = arith.constant 0 : index
    %3 = vector.load %arg1[%c0, %c0_1] : memref<8x256xf32, #tpu.memory_space<vmem>>, vector<8x256xf32>
    %c0_2 = arith.constant 0 : index
    %c0_3 = arith.constant 0 : index
    %4 = vector.load %arg2[%c0_2, %c0_3] : memref<8x256xf32, #tpu.memory_space<vmem>>, vector<8x256xf32>
    %5 = math.absf %3 : vector<8x256xf32>
    %cst = arith.constant 0.000000e+00 : f32
    %6 = vector.broadcast %cst : f32 to vector<8x256xf32>
    %7 = arith.subf %6, %5 : vector<8x256xf32>
    %8 = math.exp %7 : vector<8x256xf32>
    %cst_4 = arith.constant 1.000000e+00 : f32
    %9 = vector.broadcast %cst_4 : f32 to vector<8x256xf32>
    %10 = arith.addf %9, %8 : vector<8x256xf32>
    %11 = math.log %10 : vector<8x256xf32>
    %cst_5 = arith.constant 0.000000e+00 : f32
    %12 = vector.broadcast %cst_5 : f32 to vector<8x256xf32>
    %13 = arith.minimumf %3, %12 : vector<8x256xf32>
    %14 = arith.subf %13, %11 : vector<8x256xf32>
    %cst_6 = arith.constant -9.21034049 : f32
    %cst_7 = arith.constant -1.000050e-04 : f32
    %15 = vector.broadcast %cst_6 : f32 to vector<8x256xf32>
    %16 = arith.maximumf %15, %14 : vector<8x256xf32>
    %17 = vector.broadcast %cst_7 : f32 to vector<8x256xf32>
    %18 = arith.minimumf %17, %16 : vector<8x256xf32>
    %cst_8 = arith.constant 0.000000e+00 : f32
    %19 = vector.broadcast %cst_8 : f32 to vector<8x256xf32>
    %20 = arith.maximumf %3, %19 : vector<8x256xf32>
    %cst_9 = arith.constant 0.000000e+00 : f32
    %21 = vector.broadcast %cst_9 : f32 to vector<8x256xf32>
    %22 = arith.subf %21, %20 : vector<8x256xf32>
    %23 = arith.subf %22, %11 : vector<8x256xf32>
    %cst_10 = arith.constant -9.21034049 : f32
    %cst_11 = arith.constant -1.000050e-04 : f32
    %24 = vector.broadcast %cst_10 : f32 to vector<8x256xf32>
    %25 = arith.maximumf %24, %23 : vector<8x256xf32>
    %26 = vector.broadcast %cst_11 : f32 to vector<8x256xf32>
    %27 = arith.minimumf %26, %25 : vector<8x256xf32>
    %cst_12 = arith.constant 1.000000e+00 : f32
    %28 = vector.broadcast %cst_12 : f32 to vector<8x256xf32>
    %29 = arith.addf %28, %8 : vector<8x256xf32>
    %30 = tpu.reciprocal %29 {approx = true} : vector<8x256xf32> -> vector<8x256xf32>
    %cst_13 = arith.constant 0.000000e+00 : f32
    %31 = vector.broadcast %cst_13 : f32 to vector<8x256xf32>
    %32 = arith.cmpf oge, %3, %31 : vector<8x256xf32>
    %33 = arith.mulf %8, %30 : vector<8x256xf32>
    %34 = arith.select %32, %30, %33 : vector<8x256xi1>, vector<8x256xf32>
    %cst_14 = arith.constant 9.99999974E-5 : f32
    %cst_15 = arith.constant 0.999899983 : f32
    %35 = vector.broadcast %cst_14 : f32 to vector<8x256xf32>
    %36 = arith.maximumf %35, %34 : vector<8x256xf32>
    %37 = vector.broadcast %cst_15 : f32 to vector<8x256xf32>
    %38 = arith.minimumf %37, %36 : vector<8x256xf32>
    %cst_16 = arith.constant 1.000000e+00 : f32
    %39 = vector.broadcast %cst_16 : f32 to vector<8x256xf32>
    %40 = arith.subf %39, %38 : vector<8x256xf32>
    %cst_17 = arith.constant 1.000000e+00 : f32
    %41 = vector.broadcast %cst_17 : f32 to vector<8x256xf32>
    %42 = arith.cmpf oeq, %4, %41 : vector<8x256xf32>
    %cst_18 = arith.constant 1.000000e+00 : f32
    %43 = vector.broadcast %cst_18 : f32 to vector<8x256xf32>
    %44 = arith.cmpf olt, %4, %43 : vector<8x256xf32>
    %cst_19 = arith.constant 1.000000e+00 : f32
    %45 = vector.broadcast %cst_19 : f32 to vector<8x256xf32>
    %46 = arith.subf %45, %4 : vector<8x256xf32>
    %47 = arith.mulf %46, %46 : vector<8x256xf32>
    %48 = arith.mulf %47, %47 : vector<8x256xf32>
    %49 = arith.mulf %40, %40 : vector<8x256xf32>
    %50 = arith.mulf %18, %49 : vector<8x256xf32>
    %cst_20 = arith.constant 0.000000e+00 : f32
    %51 = vector.broadcast %cst_20 : f32 to vector<8x256xf32>
    %52 = arith.select %42, %50, %51 : vector<8x256xi1>, vector<8x256xf32>
    %53 = arith.mulf %38, %38 : vector<8x256xf32>
    %54 = arith.mulf %27, %53 : vector<8x256xf32>
    %55 = arith.mulf %54, %48 : vector<8x256xf32>
    %cst_21 = arith.constant 0.000000e+00 : f32
    %56 = vector.broadcast %cst_21 : f32 to vector<8x256xf32>
    %57 = arith.select %44, %55, %56 : vector<8x256xi1>, vector<8x256xf32>
    %c0_22 = arith.constant 0 : index
    %58 = memref.load %arg4[%c0_22] : memref<3xf32, #tpu.memory_space<smem>>
    %59 = vector.shape_cast %52 : vector<8x256xf32> to vector<1x8x256xf32>
    %cst_23 = arith.constant dense<0.000000e+00> : vector<1xf32>
    %60 = vector.multi_reduction <add>, %59, %cst_23 [1, 2] : vector<1x8x256xf32> to vector<1xf32>
    %61 = vector.shape_cast %60 : vector<1xf32> to vector<1x1x1xf32>
    %62 = vector.extract %61[0, 0, 0] : f32 from vector<1x1x1xf32>
    %63 = arith.addf %58, %62 : f32
    %c0_24 = arith.constant 0 : index
    %64 = memref.load %arg4[%c0_24] : memref<3xf32, #tpu.memory_space<smem>>
    memref.store %63, %arg4[%c0_24] : memref<3xf32, #tpu.memory_space<smem>>
    %c1 = arith.constant 1 : index
    %65 = memref.load %arg4[%c1] : memref<3xf32, #tpu.memory_space<smem>>
    %66 = vector.shape_cast %57 : vector<8x256xf32> to vector<1x8x256xf32>
    %cst_25 = arith.constant dense<0.000000e+00> : vector<1xf32>
    %67 = vector.multi_reduction <add>, %66, %cst_25 [1, 2] : vector<1x8x256xf32> to vector<1xf32>
    %68 = vector.shape_cast %67 : vector<1xf32> to vector<1x1x1xf32>
    %69 = vector.extract %68[0, 0, 0] : f32 from vector<1x1x1xf32>
    %70 = arith.addf %65, %69 : f32
    %c1_26 = arith.constant 1 : index
    %71 = memref.load %arg4[%c1_26] : memref<3xf32, #tpu.memory_space<smem>>
    memref.store %70, %arg4[%c1_26] : memref<3xf32, #tpu.memory_space<smem>>
    %c2 = arith.constant 2 : index
    %72 = memref.load %arg4[%c2] : memref<3xf32, #tpu.memory_space<smem>>
    %73 = arith.extui %42 : vector<8x256xi1> to vector<8x256xi32>
    %74 = arith.sitofp %73 : vector<8x256xi32> to vector<8x256xf32>
    %75 = vector.shape_cast %74 : vector<8x256xf32> to vector<1x8x256xf32>
    %cst_27 = arith.constant dense<0.000000e+00> : vector<1xf32>
    %76 = vector.multi_reduction <add>, %75, %cst_27 [1, 2] : vector<1x8x256xf32> to vector<1xf32>
    %77 = vector.shape_cast %76 : vector<1xf32> to vector<1x1x1xf32>
    %78 = vector.extract %77[0, 0, 0] : f32 from vector<1x1x1xf32>
    %79 = arith.addf %72, %78 : f32
    %c2_28 = arith.constant 2 : index
    %80 = memref.load %arg4[%c2_28] : memref<3xf32, #tpu.memory_space<smem>>
    memref.store %79, %arg4[%c2_28] : memref<3xf32, #tpu.memory_space<smem>>
    %c0_i32_29 = arith.constant 0 : i32
    %81 = arith.cmpi eq, %arg0, %c0_i32_29 : i32
    %82 = arith.extui %81 : i1 to i32
    %c0_i32_30 = arith.constant 0 : i32
    %83 = arith.cmpi ne, %82, %c0_i32_30 : i32
    scf.if %83 {
      %c0_31 = arith.constant 0 : index
      %84 = memref.load %arg4[%c0_31] : memref<3xf32, #tpu.memory_space<smem>>
      %c0_32 = arith.constant 0 : index
      %85 = memref.load %arg3[%c0_32] : memref<3xf32, #tpu.memory_space<smem>>
      memref.store %84, %arg3[%c0_32] : memref<3xf32, #tpu.memory_space<smem>>
      %c1_33 = arith.constant 1 : index
      %86 = memref.load %arg4[%c1_33] : memref<3xf32, #tpu.memory_space<smem>>
      %c1_34 = arith.constant 1 : index
      %87 = memref.load %arg3[%c1_34] : memref<3xf32, #tpu.memory_space<smem>>
      memref.store %86, %arg3[%c1_34] : memref<3xf32, #tpu.memory_space<smem>>
      %c2_35 = arith.constant 2 : index
      %88 = memref.load %arg4[%c2_35] : memref<3xf32, #tpu.memory_space<smem>>
      %c2_36 = arith.constant 2 : index
      %89 = memref.load %arg3[%c2_36] : memref<3xf32, #tpu.memory_space<smem>>
      memref.store %88, %arg3[%c2_36] : memref<3xf32, #tpu.memory_space<smem>>
    } else {
    }
    return
  }
  func.func @transform_0(%arg0: i32) -> (i32, i32) {
    %c0_i32 = arith.constant 0 : i32
    %c0_i32_0 = arith.constant 0 : i32
    return %arg0, %c0_i32 : i32, i32
  }
  func.func @transform_1(%arg0: i32) -> (i32, i32) {
    %c0_i32 = arith.constant 0 : i32
    %c0_i32_0 = arith.constant 0 : i32
    return %arg0, %c0_i32 : i32, i32
  }
  func.func @transform_2(%arg0: i32) -> i32 {
    %c0_i32 = arith.constant 0 : i32
    %c0_i32_0 = arith.constant 0 : i32
    return %c0_i32 : i32
  }
}

</mosaic_0001>

<llo_original>
// kernel: tpu_custom_call.1
$region0: #{tpu_custom_call.1}
  #allocation0 [shape = 'u32[]', space=smem, size = 0x4, offset = 0x4, fixed_abs, tag = 'smem constant byte address 0x4 - core index']
  #allocation1 [shape = 'u32[144,128]{1,0:T(1,128)}', space=vmem, size = 0x12000, scoped, tag = 'internal scratch']
  #allocation2 [shape = 'f32[3]{0:T(128)}', space=smem, size = 0x200, scoped, tag = 'scratch operand']
  %s0 = inlined_call_operand.hbm [shape: f32[8,256], index: 0, kind: input, shape index: {}]
  %s1 = inlined_call_operand.hbm [shape: f32[8,256], index: 1, kind: input, shape index: {}]
  %s2 = inlined_call_operand.hbm [shape: f32[3], index: 2, kind: output, shape index: {}]
  %s3 = sld [smem:[#allocation0]]
  $region34: #{tpu_custom_call.1} parent=0
    _
  %s5 = ssub.s32 1, %s3
  %s6 = scalar_select 0, %s5, %s3
  $region1: #{tpu_custom_call.1} parent=0
    #allocation3 [shape = 'u8[8192]{0}', space=vmem, size = 0x2000, scoped, tag = 'input window, operand 0, single buffered']
    #allocation4 [shape = 's32[1]{0}', space=sflag, size = 0x4, scoped, tag = 'scoped memory for tpu_custom_call.1']
    #allocation5 [shape = 's32[1]{0}', space=sflag, size = 0x4, scoped, tag = 'scoped memory for tpu_custom_call.1']
    #allocation6 [shape = 'u8[8192]{0}', space=vmem, size = 0x2000, scoped, tag = 'input window, operand 1, single buffered']
    #allocation7 [shape = 's32[1]{0}', space=sflag, size = 0x4, scoped, tag = 'scoped memory for tpu_custom_call.1']
    #allocation8 [shape = 'u8[512]{0}', space=smem, size = 0x200, scoped, tag = 'output window, operand 0, single buffered']
    %7 = vsyncpa [#allocation4], 0
    %8 = vsyncpa [#allocation7], 0
    %9 = vsyncpa [#allocation5], 0
    // Predicated region
    $region2: #{tpu_custom_call.1} parent=1 // pred_check
      _
    $region3: #{tpu_custom_call.1} parent=1 // pred_check_branch
      %11 = sbr.rel (0) target = $region5
    $region4: #{tpu_custom_call.1} parent=1 // pred_region
      %s13 = ssub.s32 256, 256
      %14 = vsyncadd [#allocation4], %s13
      %s16 = sshll.u32 [#allocation3], 4
      %s17 = int_to_ptr.vmem [resolvable:$true] %s16
      %19 = dma.hbm_to_vmem [thread:$0]  %s0, 256, %s17, [#allocation4]
    $region5: #{tpu_custom_call.1} parent=1 // pred_fallthru
      _
    // Predicated region
    $region6: #{tpu_custom_call.1} parent=1 // pred_check
      _
    $region7: #{tpu_custom_call.1} parent=1 // pred_check_branch
      %21 = sbr.rel (0) target = $region9
    $region8: #{tpu_custom_call.1} parent=1 // pred_region
      %s23 = ssub.s32 256, 256
      %24 = vsyncadd [#allocation7], %s23
      %s26 = sshll.u32 [#allocation6], 4
      %s27 = int_to_ptr.vmem [resolvable:$true] %s26
      %29 = dma.hbm_to_vmem [thread:$0]  %s1, 256, %s27, [#allocation7]
    $region9: #{tpu_custom_call.1} parent=1 // pred_fallthru
      _
    // Predicated region
    $region10: #{tpu_custom_call.1} parent=1 // pred_check
      _
    $region11: #{tpu_custom_call.1} parent=1 // pred_check_branch
      %31 = sbr.rel (0) target = $region13
    $region12: #{tpu_custom_call.1} parent=1 // pred_region
      %32 = dma.done [#allocation4], 256
    $region13: #{tpu_custom_call.1} parent=1 // pred_fallthru
      _
    // Predicated region
    $region14: #{tpu_custom_call.1} parent=1 // pred_check
      _
    $region15: #{tpu_custom_call.1} parent=1 // pred_check_branch
      %34 = sbr.rel (0) target = $region17
    $region16: #{tpu_custom_call.1} parent=1 // pred_region
      %35 = dma.done [#allocation7], 256
    $region17: #{tpu_custom_call.1} parent=1 // pred_fallthru
      _
    %p36 = scmp.eq.s32.totalorder 0, 0
    // Predicated region
    $region18: #{tpu_custom_call.1} parent=1 // pred_check
      %p37 = pneg %p36
    $region19: #{tpu_custom_call.1} parent=1 // pred_check_branch
      %39 = sbr.rel (%p37) target = $region21
    $region20: #{tpu_custom_call.1} parent=1 // pred_region
      %s40 = scalar_lea.smem [#allocation2], 0
      %41 = sst [smem:[%s40]] 0.0
      %s42 = scalar_lea.smem [#allocation2], 1
      %43 = sst [smem:[%s42]] 0.0
      %s44 = scalar_lea.smem [#allocation2], 2
      %45 = sst [smem:[%s44]] 0.0
    $region21: #{tpu_custom_call.1} parent=1 // pred_fallthru
      _
    %v46 = vld [vmem:[#allocation3] sm:$0xff]
    %v47 = vld [vmem:[#allocation3 + $0x8] sm:$0xff]
    %v48 = vld [vmem:[#allocation6] sm:$0xff]
    %v49 = vld [vmem:[#allocation6 + $0x8] sm:$0xff]
    %v50 = vand.u32 2147483647, %v46
    %v51 = vand.u32 2147483647, %v47
    %v52 = vsub.f32 0.0, %v50
    %v53 = vsub.f32 0.0, %v51
    %v54 = vmul.f32 %v52, 1.442695
    %v55 = vpow.pop %v54
    %v56 = vmul.f32 %v53, 1.442695
    %v57 = vpow.pop %v56
    %v58 = vadd.f32 %v55, 1.0
    %v59 = vadd.f32 %v57, 1.0
    %v60 = vlog2.pop %v58
    %v61 = vmul.f32 %v60, 0.6931472
    %v62 = vlog2.pop %v59
    %v63 = vmul.f32 %v62, 0.6931472
    %v64 = vmin.f32 %v46, 0.0
    %v65 = vmin.f32 %v47, 0.0
    %v66 = vsub.f32 %v64, %v61
    %v67 = vsub.f32 %v65, %v63
    %v68 = vmax.f32 %v66, -9.2103405
    %v69 = vmax.f32 %v67, -9.2103405
    %v70 = vmin.f32 %v68, -0.000100005
    %v71 = vmin.f32 %v69, -0.000100005
    %v72 = vmax.f32 %v46, 0.0
    %v73 = vmax.f32 %v47, 0.0
    %v74 = vsub.f32 0.0, %v72
    %v75 = vsub.f32 0.0, %v73
    %v76 = vsub.f32 %v74, %v61
    %v77 = vsub.f32 %v75, %v63
    %v78 = vmax.f32 %v76, -9.2103405
    %v79 = vmax.f32 %v77, -9.2103405
    %v80 = vmin.f32 %v78, -0.000100005
    %v81 = vmin.f32 %v79, -0.000100005
    %v82 = vrcp.pop %v58
    %v83 = vrcp.pop %v59
    %vm84 = vcmp.ge.f32.partialorder %v46, 0.0
    %vm85 = vcmp.ge.f32.partialorder %v47, 0.0
    %v86 = vmul.f32 %v55, %v82
    %v87 = vmul.f32 %v57, %v83
    %v88 = vsel %vm84, %v82, %v86
    %v89 = vsel %vm85, %v83, %v87
    %v90 = vmax.f32 %v88, 0.0001
    %v91 = vmax.f32 %v89, 0.0001
    %v92 = vmin.f32 %v90, 0.9999
    %v93 = vmin.f32 %v91, 0.9999
    %v94 = vsub.f32 1.0, %v92
    %v95 = vsub.f32 1.0, %v93
    %vm96 = vcmp.eq.f32.partialorder %v48, 1.0
    %vm97 = vcmp.eq.f32.partialorder %v49, 1.0
    %vm98 = vcmp.lt.f32.partialorder %v48, 1.0
    %vm99 = vcmp.lt.f32.partialorder %v49, 1.0
    %v100 = vsub.f32 1.0, %v48
    %v101 = vsub.f32 1.0, %v49
    %v102 = vmul.f32 %v100, %v100
    %v103 = vmul.f32 %v101, %v101
    %v104 = vmul.f32 %v102, %v102
    %v105 = vmul.f32 %v103, %v103
    %v106 = vmul.f32 %v94, %v94
    %v107 = vmul.f32 %v95, %v95
    %v108 = vmul.f32 %v70, %v106
    %v109 = vmul.f32 %v71, %v107
    %v110 = vsel %vm96, %v108, 0.0
    %v111 = vsel %vm97, %v109, 0.0
    %v112 = vmul.f32 %v92, %v92
    %v113 = vmul.f32 %v93, %v93
    %v114 = vmul.f32 %v80, %v112
    %v115 = vmul.f32 %v81, %v113
    %v116 = vmul.f32 %v114, %v104
    %v117 = vmul.f32 %v115, %v105
    %v118 = vsel %vm98, %v116, 0.0
    %v119 = vsel %vm99, %v117, 0.0
    %s120 = sld [smem:[#allocation2]]
    %v121 = vadd.f32 %v110, %v111
    %122 = vadd.xlane.f32.xlu0 %v121
    %v123 = vpop.xlane.xlu0 %122
    %v124 = vrot.slane %v123, 4
    %v125 = vadd.f32 %v123, %v124
    %v126 = vrot.slane %v125, 2
    %v127 = vadd.f32 %v125, %v126
    %v128 = vrot.slane %v127, 1
    %v129 = vadd.f32 %v127, %v128
    %s130 = vtos %v129
    %s131 = sadd.f32 %s120, %s130
    %s132 = scalar_lea.smem [#allocation2], 0
    %133 = sst [smem:[%s132]] %s131
    %s134 = sld [smem:[#allocation2 + $0x1]]
    %v135 = vadd.f32 %v118, %v119
    %136 = vadd.xlane.f32.xlu0 %v135
    %v137 = vpop.xlane.xlu0 %136
    %v138 = vrot.slane %v137, 4
    %v139 = vadd.f32 %v137, %v138
    %v140 = vrot.slane %v139, 2
    %v141 = vadd.f32 %v139, %v140
    %v142 = vrot.slane %v141, 1
    %v143 = vadd.f32 %v141, %v142
    %s144 = vtos %v143
    %s145 = sadd.f32 %s134, %s144
    %s146 = scalar_lea.smem [#allocation2], 1
    %147 = sst [smem:[%s146]] %s145
    %s148 = sld [smem:[#allocation2 + $0x2]]
    %v149 = vsel %vm96, 1, 0
    %v150 = vsel %vm97, 1, 0
    %v151 = vcvt.s32.f32 %v149
    %v152 = vcvt.s32.f32 %v150
    %v153 = vadd.f32 %v151, %v152
    %154 = vadd.xlane.f32.xlu0 %v153
    %v155 = vpop.xlane.xlu0 %154
    %v156 = vrot.slane %v155, 4
    %v157 = vadd.f32 %v155, %v156
    %v158 = vrot.slane %v157, 2
    %v159 = vadd.f32 %v157, %v158
    %v160 = vrot.slane %v159, 1
    %v161 = vadd.f32 %v159, %v160
    %s162 = vtos %v161
    %s163 = sadd.f32 %s148, %s162
    %s164 = scalar_lea.smem [#allocation2], 2
    %165 = sst [smem:[%s164]] %s163
    // Predicated region
    $region22: #{tpu_custom_call.1} parent=1 // pred_check
      %p166 = pneg %p36
    $region23: #{tpu_custom_call.1} parent=1 // pred_check_branch
      %168 = sbr.rel (%p166) target = $region25
    $region24: #{tpu_custom_call.1} parent=1 // pred_region
      %s169 = sld [smem:[#allocation2]]
      %s170 = scalar_lea.smem [#allocation8], 0
      %171 = sst [smem:[%s170]] %s169
      %s172 = sld [smem:[#allocation2 + $0x1]]
      %s173 = scalar_lea.smem [#allocation8], 1
      %174 = sst [smem:[%s173]] %s172
      %s175 = sld [smem:[#allocation2 + $0x2]]
      %s176 = scalar_lea.smem [#allocation8], 2
      %177 = sst [smem:[%s176]] %s175
    $region25: #{tpu_custom_call.1} parent=1 // pred_fallthru
      _
    // Predicated region
    $region26: #{tpu_custom_call.1} parent=1 // pred_check
      _
    $region27: #{tpu_custom_call.1} parent=1 // pred_check_branch
      %179 = sbr.rel (0) target = $region29
    $region28: #{tpu_custom_call.1} parent=1 // pred_region
      %s181 = ssub.s32 16, 16
      %182 = vsyncadd [#allocation5], %s181
      %185 = dma.smem_to_hbm [#allocation8], 16, %s2, [#allocation5]
    $region29: #{tpu_custom_call.1} parent=1 // pred_fallthru
      _
    // Predicated region
    $region30: #{tpu_custom_call.1} parent=1 // pred_check
      _
    $region31: #{tpu_custom_call.1} parent=1 // pred_check_branch
      %187 = sbr.rel (0) target = $region33
    $region32: #{tpu_custom_call.1} parent=1 // pred_region
      %188 = dma.done [#allocation5], 16
    $region33: #{tpu_custom_call.1} parent=1 // pred_fallthru
      _
    %189 = sfence
    %190 = vsyncpa [#allocation4], 1
    %191 = vsyncpa [#allocation7], 1
    %192 = vsyncpa [#allocation5], 1

</llo_original>
